<compile_context>
chip_gen: v5e
topology: v5e:2x2
jax: 0.10.0
libtpu: 0.0.40
codegen_flags: <defaults>
</compile_context>

<pallas_src>
import jax
import jax.numpy as jnp
from jax import lax
from jax.experimental import pallas as pl
from jax.experimental.pallas import tpu as pltpu

VECTOR_SIZE = 32            # opt.vector_size
H1, H2, H3, OUT = 128, 256, 128, 1


def _round_up(n, m):
    return ((n + m - 1) // m) * m


def _choose_tile(batch, cap=2048):
    # >= 2 grid steps for large batches (v7x: 2 TensorCores share the parallel
    # grid axis), tiles as big as possible to amortize per-step overhead,
    # capped so VMEM stays well under v5e's default scoped limit.
    tm = _round_up(max(-(-batch // 2), 1), 128)
    return max(128, min(cap, tm))


def discriminator_kernel(x_ref,
                         w1_ref, b1_ref,
                         w2_ref, b2_ref,
                         w3_ref, b3_ref,
                         w4t_ref, b4_ref,
                         o_ref):
    """Whole 4-layer MLP fused per batch tile.

    Weights/biases use constant index_maps so they stay VMEM-resident; only
    the x tile streams in and a single (1, tm) validity row streams out.
    """
    cd = w1_ref.dtype          # compute dtype for matmul/elementwise (f32 or bf16)

    def layer(h, w_ref, b_ref):
        a = jnp.dot(h, w_ref[...], preferred_element_type=jnp.float32)
        a = a.astype(cd) + b_ref[...]
        return jnp.maximum(a, 0.2 * a)            # LeakyReLU(0.2): mul + max

    h = layer(x_ref[...].astype(cd), w1_ref, b1_ref)        # (tm, 128)
    h = layer(h, w2_ref, b2_ref)                             # (tm, 256)
    h = layer(h, w3_ref, b3_ref)                             # (tm, 128)

    # Final Linear(128, 1) as a rhs-transposed dot: (1,128) . (tm,128)^T
    # -> lane-dense (1, tm) row of logits (attention q.k^T dimension numbers).
    logit = lax.dot_general(w4t_ref[...], h,
                            (((1,), (1,)), ((), ())),
                            preferred_element_type=jnp.float32)    # (1, tm)
    logit = logit + b4_ref[0]                     # scalar bias from SMEM

    # Exact sigmoid in f32 (only tm elements per step -> negligible).
    o_ref[...] = 1.0 / (1.0 + jnp.exp(-logit))


def prepare_params(params, compute_dtype=jnp.bfloat16):
    """One-time weight prep (hoisted out of the forward): cast matmul / bias
    operands to the compute dtype and lay the last layer out as a (1, H3) row.

    compute_dtype: bf16 (MXU/VPU-native on v6e/v7x, still valid on v5e's MXU)
    or f32 (most conservative everywhere)."""
    (w1, b1), (w2, b2), (w3, b3), (w4, b4) = params
    cd = compute_dtype
    return dict(
        w1=w1.astype(cd), b1=b1.reshape(1, H1).astype(cd),
        w2=w2.astype(cd), b2=b2.reshape(1, H2).astype(cd),
        w3=w3.astype(cd), b3=b3.reshape(1, H3).astype(cd),
        w4t=w4.reshape(1, H3).astype(cd),            # (H3, 1) -> (1, H3)
        b4=b4.reshape(1).astype(jnp.float32),        # scalar bias, f32, SMEM
    )


def discriminator_forward(x, prepared, *, tm=None):
    """Fused discriminator forward: x (B, VECTOR_SIZE) -> (B, 1) validity."""
    B, V = x.shape
    p = prepared
    tm = _choose_tile(B) if tm is None else _round_up(tm, 128)
    grid = pl.cdiv(B, tm)              # partial last tile handled by Pallas

    full = lambda shape: pl.BlockSpec(shape, lambda i: (0, 0))

    out_row = pl.pallas_call(
        discriminator_kernel,
        out_shape=jax.ShapeDtypeStruct((1, grid * tm), jnp.float32),
        grid_spec=pltpu.PrefetchScalarGridSpec(
            num_scalar_prefetch=0,
            grid=(grid,),
            in_specs=[
                pl.BlockSpec((tm, V), lambda i: (i, 0)),    # x batch tile
                full((V, H1)),   full((1, H1)),
                full((H1, H2)),  full((1, H2)),
                full((H2, H3)),  full((1, H3)),
                full((1, H3)),                              # w4 as a row
                pl.BlockSpec(memory_space=pltpu.MemorySpace.SMEM),  # b4 scalar
            ],
            out_specs=pl.BlockSpec((1, tm), lambda i: (0, i)),
        ),
        compiler_params=pltpu.CompilerParams(
            dimension_semantics=("parallel",),
            vmem_limit_bytes=32 * 1024 * 1024),
    )(x, p["w1"], p["b1"], p["w2"], p["b2"], p["w3"], p["b3"],
      p["w4t"], p["b4"])

    # Compact (1, grid*tm) row -> (B, 1); only the garbage tail of a partial
    # last tile is dropped.
    return out_row[0, :B].reshape(B, 1)


def init_params(key):
    """Deterministic synthetic init (PyTorch-Linear-like uniform fan-in)."""
    dims = [(VECTOR_SIZE, H1), (H1, H2), (H2, H3), (H3, OUT)]
    params = []
    for fan_in, fan_out in dims:
        key, kw, kb = jax.random.split(key, 3)
        bound = 1.0 / jnp.sqrt(float(fan_in))
        w = jax.random.uniform(kw, (fan_in, fan_out), jnp.float32, -bound, bound)
        b = jax.random.uniform(kb, (1, fan_out), jnp.float32, -bound, bound)
        params.append((w, b))
    return params


def reference_forward(x, params):
    h = x
    for i, (w, b) in enumerate(params):
        h = h @ w + b
        if i < 3:
            h = jnp.where(h > 0, h, 0.2 * h)
    return jax.nn.sigmoid(h)


if __name__ == "__main__":
    key = jax.random.PRNGKey(0)
    key, kx = jax.random.split(key)

    # Batch that is NOT a multiple of the tile -> exercises the partial-tile path.
    B = 100
    x = jax.random.normal(kx, (B, VECTOR_SIZE), jnp.float32)
    params = init_params(key)
    ref = reference_forward(x, params)

    # float32 compute (most conservative on every TPU generation).
    out_f32 = jax.block_until_ready(
        discriminator_forward(x, prepare_params(params, jnp.float32)))
    assert out_f32.shape == (B, OUT)
    assert jnp.allclose(out_f32, ref, atol=1e-3, rtol=0), "f32 kernel mismatch"

    # bfloat16 compute (default; MXU/VPU-native on v6e/v7x), f32 accumulation.
    out_bf16 = jax.block_until_ready(
        discriminator_forward(x, prepare_params(params)))
    assert out_bf16.shape == (B, OUT)
    assert jnp.allclose(out_bf16, ref, atol=5e-2, rtol=0), "bf16 kernel mismatch"

    print("KERNEL_OK")
</pallas_src>

<mosaic_0001>
module attributes {stable_mosaic.version = 11 : i64} {
  func.func @discriminator_kernel(%arg0: i32, %arg1: memref<128x32xf32, #tpu.memory_space<vmem>>, %arg2: memref<32x128xf32, #tpu.memory_space<vmem>>, %arg3: memref<1x128xf32, #tpu.memory_space<vmem>>, %arg4: memref<128x256xf32, #tpu.memory_space<vmem>>, %arg5: memref<1x256xf32, #tpu.memory_space<vmem>>, %arg6: memref<256x128xf32, #tpu.memory_space<vmem>>, %arg7: memref<1x128xf32, #tpu.memory_space<vmem>>, %arg8: memref<1x128xf32, #tpu.memory_space<vmem>>, %arg9: memref<1xf32, #tpu.memory_space<smem>>, %arg10: memref<1x128xf32, #tpu.memory_space<vmem>>) attributes {dimension_semantics = [#tpu.dimension_semantics<parallel>], iteration_bounds = array<i64: 1>, scalar_prefetch = 0 : i64, scratch_operands = 0 : i64, tpu.core_type = #tpu.core_type<tc>, window_params = [{transform_indices = @transform_0, window_bounds = array<i64: 128, 32>}, {pipeline_mode = #tpu.pipeline_mode<synchronous>, transform_indices = @transform_1, window_bounds = array<i64: 32, 128>}, {pipeline_mode = #tpu.pipeline_mode<synchronous>, transform_indices = @transform_2, window_bounds = array<i64: 1, 128>}, {pipeline_mode = #tpu.pipeline_mode<synchronous>, transform_indices = @transform_3, window_bounds = array<i64: 128, 256>}, {pipeline_mode = #tpu.pipeline_mode<synchronous>, transform_indices = @transform_4, window_bounds = array<i64: 1, 256>}, {pipeline_mode = #tpu.pipeline_mode<synchronous>, transform_indices = @transform_5, window_bounds = array<i64: 256, 128>}, {pipeline_mode = #tpu.pipeline_mode<synchronous>, transform_indices = @transform_6, window_bounds = array<i64: 1, 128>}, {pipeline_mode = #tpu.pipeline_mode<synchronous>, transform_indices = @transform_7, window_bounds = array<i64: 1, 128>}, {transform_indices = @transform_8, window_bounds = array<i64: 1>}, {transform_indices = @transform_9, window_bounds = array<i64: 1, 128>}]} {
    %c0 = arith.constant 0 : index
    %c0_0 = arith.constant 0 : index
    %0 = vector.load %arg1[%c0, %c0_0] : memref<128x32xf32, #tpu.memory_space<vmem>>, vector<128x32xf32>
    %c0_1 = arith.constant 0 : index
    %c0_2 = arith.constant 0 : index
    %1 = vector.load %arg2[%c0_1, %c0_2] : memref<32x128xf32, #tpu.memory_space<vmem>>, vector<32x128xf32>
    %cst = arith.constant dense<0.000000e+00> : vector<128x128xf32>
    %2 = tpu.matmul %0, %1, %cst {dimension_numbers = #tpu.dot_dimension_numbers<[1], [0], [0], [1], [0, 0, 1, 1], [], []>} : vector<128x32xf32>, vector<32x128xf32>, vector<128x128xf32> -> vector<128x128xf32>
    %c0_3 = arith.constant 0 : index
    %c0_4 = arith.constant 0 : index
    %3 = vector.load %arg3[%c0_3, %c0_4] : memref<1x128xf32, #tpu.memory_space<vmem>>, vector<1x128xf32>
    %4 = vector.broadcast %3 : vector<1x128xf32> to vector<128x128xf32>
    %5 = arith.addf %2, %4 : vector<128x128xf32>
    %cst_5 = arith.constant 2.000000e-01 : f32
    %6 = vector.broadcast %cst_5 : f32 to vector<128x128xf32>
    %7 = arith.mulf %6, %5 : vector<128x128xf32>
    %8 = arith.maximumf %5, %7 : vector<128x128xf32>
    %c0_6 = arith.constant 0 : index
    %c0_7 = arith.constant 0 : index
    %9 = vector.load %arg4[%c0_6, %c0_7] : memref<128x256xf32, #tpu.memory_space<vmem>>, vector<128x256xf32>
    %cst_8 = arith.constant dense<0.000000e+00> : vector<128x256xf32>
    %10 = tpu.matmul %8, %9, %cst_8 {dimension_numbers = #tpu.dot_dimension_numbers<[1], [0], [0], [1], [0, 0, 1, 1], [], []>} : vector<128x128xf32>, vector<128x256xf32>, vector<128x256xf32> -> vector<128x256xf32>
    %c0_9 = arith.constant 0 : index
    %c0_10 = arith.constant 0 : index
    %11 = vector.load %arg5[%c0_9, %c0_10] : memref<1x256xf32, #tpu.memory_space<vmem>>, vector<1x256xf32>
    %12 = vector.broadcast %11 : vector<1x256xf32> to vector<128x256xf32>
    %13 = arith.addf %10, %12 : vector<128x256xf32>
    %cst_11 = arith.constant 2.000000e-01 : f32
    %14 = vector.broadcast %cst_11 : f32 to vector<128x256xf32>
    %15 = arith.mulf %14, %13 : vector<128x256xf32>
    %16 = arith.maximumf %13, %15 : vector<128x256xf32>
    %c0_12 = arith.constant 0 : index
    %c0_13 = arith.constant 0 : index
    %17 = vector.load %arg6[%c0_12, %c0_13] : memref<256x128xf32, #tpu.memory_space<vmem>>, vector<256x128xf32>
    %cst_14 = arith.constant dense<0.000000e+00> : vector<128x128xf32>
    %18 = tpu.matmul %16, %17, %cst_14 {dimension_numbers = #tpu.dot_dimension_numbers<[1], [0], [0], [1], [0, 0, 1, 1], [], []>} : vector<128x256xf32>, vector<256x128xf32>, vector<128x128xf32> -> vector<128x128xf32>
    %c0_15 = arith.constant 0 : index
    %c0_16 = arith.constant 0 : index
    %19 = vector.load %arg7[%c0_15, %c0_16] : memref<1x128xf32, #tpu.memory_space<vmem>>, vector<1x128xf32>
    %20 = vector.broadcast %19 : vector<1x128xf32> to vector<128x128xf32>
    %21 = arith.addf %18, %20 : vector<128x128xf32>
    %cst_17 = arith.constant 2.000000e-01 : f32
    %22 = vector.broadcast %cst_17 : f32 to vector<128x128xf32>
    %23 = arith.mulf %22, %21 : vector<128x128xf32>
    %24 = arith.maximumf %21, %23 : vector<128x128xf32>
    %c0_18 = arith.constant 0 : index
    %c0_19 = arith.constant 0 : index
    %25 = vector.load %arg8[%c0_18, %c0_19] : memref<1x128xf32, #tpu.memory_space<vmem>>, vector<1x128xf32>
    %cst_20 = arith.constant dense<0.000000e+00> : vector<1x128xf32>
    %26 = tpu.matmul %25, %24, %cst_20 {dimension_numbers = #tpu.dot_dimension_numbers<[1], [1], [0], [0], [0, 0, 1, 0], [], []>} : vector<1x128xf32>, vector<128x128xf32>, vector<1x128xf32> -> vector<1x128xf32>
    %c0_21 = arith.constant 0 : index
    %27 = memref.load %arg9[%c0_21] : memref<1xf32, #tpu.memory_space<smem>>
    %28 = vector.broadcast %27 : f32 to vector<1x128xf32>
    %29 = arith.addf %26, %28 : vector<1x128xf32>
    %cst_22 = arith.constant 0.000000e+00 : f32
    %30 = vector.broadcast %cst_22 : f32 to vector<1x128xf32>
    %31 = arith.subf %30, %29 : vector<1x128xf32>
    %32 = math.exp %31 : vector<1x128xf32>
    %cst_23 = arith.constant 1.000000e+00 : f32
    %33 = vector.broadcast %cst_23 : f32 to vector<1x128xf32>
    %34 = arith.addf %33, %32 : vector<1x128xf32>
    %cst_24 = arith.constant 1.000000e+00 : f32
    %35 = vector.broadcast %cst_24 : f32 to vector<1x128xf32>
    %36 = arith.divf %35, %34 : vector<1x128xf32>
    %c0_25 = arith.constant 0 : index
    %c0_26 = arith.constant 0 : index
    %37 = vector.load %arg10[%c0_25, %c0_26] : memref<1x128xf32, #tpu.memory_space<vmem>>, vector<1x128xf32>
    tpu.vector_store %arg10[%c0_25, %c0_26], %36 {strides = array<i32>} : memref<1x128xf32, #tpu.memory_space<vmem>>, vector<1x128xf32>,
    return
  }
  func.func @transform_0(%arg0: i32) -> (i32, i32) {
    %c0_i32 = arith.constant 0 : i32
    %c0_i32_0 = arith.constant 0 : i32
    return %arg0, %c0_i32 : i32, i32
  }
  func.func @transform_1(%arg0: i32) -> (i32, i32) {
    %c0_i32 = arith.constant 0 : i32
    %c0_i32_0 = arith.constant 0 : i32
    %c0_i32_1 = arith.constant 0 : i32
    return %c0_i32, %c0_i32_0 : i32, i32
  }
  func.func @transform_2(%arg0: i32) -> (i32, i32) {
    %c0_i32 = arith.constant 0 : i32
    %c0_i32_0 = arith.constant 0 : i32
    %c0_i32_1 = arith.constant 0 : i32
    return %c0_i32, %c0_i32_0 : i32, i32
  }
  func.func @transform_3(%arg0: i32) -> (i32, i32) {
    %c0_i32 = arith.constant 0 : i32
    %c0_i32_0 = arith.constant 0 : i32
    %c0_i32_1 = arith.constant 0 : i32
    return %c0_i32, %c0_i32_0 : i32, i32
  }
  func.func @transform_4(%arg0: i32) -> (i32, i32) {
    %c0_i32 = arith.constant 0 : i32
    %c0_i32_0 = arith.constant 0 : i32
    %c0_i32_1 = arith.constant 0 : i32
    return %c0_i32, %c0_i32_0 : i32, i32
  }
  func.func @transform_5(%arg0: i32) -> (i32, i32) {
    %c0_i32 = arith.constant 0 : i32
    %c0_i32_0 = arith.constant 0 : i32
    %c0_i32_1 = arith.constant 0 : i32
    return %c0_i32, %c0_i32_0 : i32, i32
  }
  func.func @transform_6(%arg0: i32) -> (i32, i32) {
    %c0_i32 = arith.constant 0 : i32
    %c0_i32_0 = arith.constant 0 : i32
    %c0_i32_1 = arith.constant 0 : i32
    return %c0_i32, %c0_i32_0 : i32, i32
  }
  func.func @transform_7(%arg0: i32) -> (i32, i32) {
    %c0_i32 = arith.constant 0 : i32
    %c0_i32_0 = arith.constant 0 : i32
    %c0_i32_1 = arith.constant 0 : i32
    return %c0_i32, %c0_i32_0 : i32, i32
  }
  func.func @transform_8(%arg0: i32) -> i32 {
    %c0_i32 = arith.constant 0 : i32
    %c0_i32_0 = arith.constant 0 : i32
    return %c0_i32 : i32
  }
  func.func @transform_9(%arg0: i32) -> (i32, i32) {
    %c0_i32 = arith.constant 0 : i32
    %c0_i32_0 = arith.constant 0 : i32
    return %c0_i32, %arg0 : i32, i32
  }
}

</mosaic_0001>

<llo_original>
// kernel: tpu_custom_call.1
$region0: #{tpu_custom_call.1}
  #allocation0 [shape = 'u32[]', space=smem, size = 0x4, offset = 0x4, fixed_abs, tag = 'smem constant byte address 0x4 - core index']
  #allocation1 [shape = 'u32[72,128]{1,0:T(1,128)}', space=vmem, size = 0x9000, scoped, tag = 'internal scratch']
  #allocation2 [shape = 'f32[1]{0:T(128)S(6)}', space=smem, size = 0x200, scoped, tag = 'scoped memory for tpu_custom_call.1']
  %s0 = inlined_call_operand.vmem [shape: f32[100,32], index: 0, kind: input, shape index: {}]
  %s1 = inlined_call_operand.vmem [shape: f32[32,128], index: 1, kind: input, shape index: {}]
  %s2 = inlined_call_operand.vmem [shape: f32[1,128], index: 2, kind: input, shape index: {}]
  %s3 = inlined_call_operand.hbm [shape: f32[128,256], index: 3, kind: input, shape index: {}]
  %s4 = inlined_call_operand.vmem [shape: f32[1,256], index: 4, kind: input, shape index: {}]
  %s5 = inlined_call_operand.hbm [shape: f32[256,128], index: 5, kind: input, shape index: {}]
  %s6 = inlined_call_operand.vmem [shape: f32[1,128], index: 6, kind: input, shape index: {}]
  %s7 = inlined_call_operand.vmem [shape: f32[1,128], index: 7, kind: input, shape index: {}]
  %s8 = inlined_call_operand.<no memory space> [shape: f32[1], index: 8, kind: input, shape index: {}]
  %s9 = inlined_call_operand.hbm [shape: f32[1,128], index: 9, kind: output, shape index: {}]
  %s10 = sld [smem:[#allocation0]]
  $region54: #{tpu_custom_call.1} parent=0
    _
  %s12 = ssub.s32 1, %s10
  %s13 = scalar_select 0, %s12, %s10
  %14 = sst [smem:[#allocation2]] %s8
  $region1: #{tpu_custom_call.1} parent=0
    #allocation3 [shape = 'u8[131072]{0}', space=vmem, size = 0x20000, scoped, tag = 'input window, operand 3, single buffered']
    #allocation4 [shape = 's32[1]{0}', space=sflag, size = 0x4, scoped, tag = 'scoped memory for tpu_custom_call.1']
    #allocation5 [shape = 's32[1]{0}', space=sflag, size = 0x4, scoped, tag = 'scoped memory for tpu_custom_call.1']
    #allocation6 [shape = 'u8[131072]{0}', space=vmem, size = 0x20000, scoped, tag = 'input window, operand 5, single buffered']
    #allocation7 [shape = 's32[1]{0}', space=sflag, size = 0x4, scoped, tag = 'scoped memory for tpu_custom_call.1']
    #allocation8 [shape = 'u8[512]{0}', space=vmem, size = 0x400, scoped, tag = 'output window, operand 0, single buffered']
    %15 = vsyncpa [#allocation4], 0
    %16 = vsyncpa [#allocation7], 0
    %17 = vsyncpa [#allocation5], 0
    // Predicated region
    $region2: #{tpu_custom_call.1} parent=1 // pred_check
      _
    $region3: #{tpu_custom_call.1} parent=1 // pred_check_branch
      %19 = sbr.rel (0) target = $region5
    $region4: #{tpu_custom_call.1} parent=1 // pred_region
      _
    $region5: #{tpu_custom_call.1} parent=1 // pred_fallthru
      _
    // Predicated region
    $region6: #{tpu_custom_call.1} parent=1 // pred_check
      _
    $region7: #{tpu_custom_call.1} parent=1 // pred_check_branch
      %21 = sbr.rel (0) target = $region9
    $region8: #{tpu_custom_call.1} parent=1 // pred_region
      _
    $region9: #{tpu_custom_call.1} parent=1 // pred_fallthru
      _
    // Predicated region
    $region10: #{tpu_custom_call.1} parent=1 // pred_check
      _
    $region11: #{tpu_custom_call.1} parent=1 // pred_check_branch
      %23 = sbr.rel (0) target = $region13
    $region12: #{tpu_custom_call.1} parent=1 // pred_region
      _
    $region13: #{tpu_custom_call.1} parent=1 // pred_fallthru
      _
    // Predicated region
    $region14: #{tpu_custom_call.1} parent=1 // pred_check
      _
    $region15: #{tpu_custom_call.1} parent=1 // pred_check_branch
      %25 = sbr.rel (0) target = $region17
    $region16: #{tpu_custom_call.1} parent=1 // pred_region
      %27 = vsyncadd [#allocation4], 0
      %s28 = sshll.u32 %s3, 4
      %s29 = int_to_ptr.hbm [resolvable:$true] %s28
      %s30 = sshll.u32 [#allocation3], 4
      %s31 = int_to_ptr.vmem [resolvable:$true] %s30
      %36 = dma.hbm_to_vmem [thread:$0]  %s29, 4096, %s31, [#allocation4], 256, 256, 16
    $region17: #{tpu_custom_call.1} parent=1 // pred_fallthru
      _
    // Predicated region
    $region18: #{tpu_custom_call.1} parent=1 // pred_check
      _
    $region19: #{tpu_custom_call.1} parent=1 // pred_check_branch
      %38 = sbr.rel (0) target = $region21
    $region20: #{tpu_custom_call.1} parent=1 // pred_region
      _
    $region21: #{tpu_custom_call.1} parent=1 // pred_fallthru
      _
    // Predicated region
    $region22: #{tpu_custom_call.1} parent=1 // pred_check
      _
    $region23: #{tpu_custom_call.1} parent=1 // pred_check_branch
      %40 = sbr.rel (0) target = $region25
    $region24: #{tpu_custom_call.1} parent=1 // pred_region
      %42 = vsyncadd [#allocation7], 0
      %s43 = sshll.u32 %s5, 4
      %s44 = int_to_ptr.hbm [resolvable:$true] %s43
      %s45 = sshll.u32 [#allocation6], 4
      %s46 = int_to_ptr.vmem [resolvable:$true] %s45
      %51 = dma.hbm_to_vmem [thread:$0]  %s44, 4096, %s46, [#allocation7], 128, 128, 8
    $region25: #{tpu_custom_call.1} parent=1 // pred_fallthru
      _
    // Predicated region
    $region26: #{tpu_custom_call.1} parent=1 // pred_check
      _
    $region27: #{tpu_custom_call.1} parent=1 // pred_check_branch
      %53 = sbr.rel (0) target = $region29
    $region28: #{tpu_custom_call.1} parent=1 // pred_region
      _
    $region29: #{tpu_custom_call.1} parent=1 // pred_fallthru
      _
    // Predicated region
    $region30: #{tpu_custom_call.1} parent=1 // pred_check
      _
    $region31: #{tpu_custom_call.1} parent=1 // pred_check_branch
      %55 = sbr.rel (0) target = $region33
    $region32: #{tpu_custom_call.1} parent=1 // pred_region
      _
    $region33: #{tpu_custom_call.1} parent=1 // pred_fallthru
      _
    // Predicated region
    $region34: #{tpu_custom_call.1} parent=1 // pred_check
      _
    $region35: #{tpu_custom_call.1} parent=1 // pred_check_branch
      %57 = sbr.rel (0) target = $region37
    $region36: #{tpu_custom_call.1} parent=1 // pred_region
      _
    $region37: #{tpu_custom_call.1} parent=1 // pred_fallthru
      _
    // Predicated region
    $region38: #{tpu_custom_call.1} parent=1 // pred_check
      _
    $region39: #{tpu_custom_call.1} parent=1 // pred_check_branch
      %59 = sbr.rel (0) target = $region41
    $region40: #{tpu_custom_call.1} parent=1 // pred_region
      %61 = dma.done [#allocation4], 4096
    $region41: #{tpu_custom_call.1} parent=1 // pred_fallthru
      _
    // Predicated region
    $region42: #{tpu_custom_call.1} parent=1 // pred_check
      _
    $region43: #{tpu_custom_call.1} parent=1 // pred_check_branch
      %63 = sbr.rel (0) target = $region45
    $region44: #{tpu_custom_call.1} parent=1 // pred_region
      %65 = dma.done [#allocation7], 4096
    $region45: #{tpu_custom_call.1} parent=1 // pred_fallthru
      _
    %v66 = vld [vmem:[%s0] sm:$0xff]
    %v67 = vld [vmem:[%s0 + $0x8] sm:$0xff]
    %v68 = vld [vmem:[%s0 + $0x10] sm:$0xff]
    %v69 = vld [vmem:[%s0 + $0x18] sm:$0xff]
    %v70 = vld [vmem:[%s0 + $0x20] sm:$0xff]
    %v71 = vld [vmem:[%s0 + $0x28] sm:$0xff]
    %v72 = vld [vmem:[%s0 + $0x30] sm:$0xff]
    %v73 = vld [vmem:[%s0 + $0x38] sm:$0xff]
    %v74 = vld [vmem:[%s0 + $0x40] sm:$0xff]
    %v75 = vld [vmem:[%s0 + $0x48] sm:$0xff]
    %v76 = vld [vmem:[%s0 + $0x50] sm:$0xff]
    %v77 = vld [vmem:[%s0 + $0x58] sm:$0xff]
    %v78 = vld [vmem:[%s0 + $0x60] sm:$0xff]
    %v79 = vld [vmem:[%s0 + $0x68] sm:$0xff]
    %v80 = vld [vmem:[%s0 + $0x70] sm:$0xff]
    %v81 = vld [vmem:[%s0 + $0x78] sm:$0xff]
    %v82 = vld [vmem:[%s1] sm:$0xff]
    %v83 = vld [vmem:[%s1 + $0x8] sm:$0xff]
    %v84 = vld [vmem:[%s1 + $0x10] sm:$0xff]
    %v85 = vld [vmem:[%s1 + $0x18] sm:$0xff]
    %v86 = vld [vmem:[%s2] sm:$0x1]
    %v88 = vperm.slane %v86, 0
    %vm90 = vcmask 261120
    %v92 = vsel %vm90, %v66, 0
    %v95 = vsel %vm90, %v67, 0
    %v98 = vsel %vm90, %v68, 0
    %v101 = vsel %vm90, %v69, 0
    %v104 = vsel %vm90, %v70, 0
    %v107 = vsel %vm90, %v71, 0
    %v110 = vsel %vm90, %v72, 0
    %v113 = vsel %vm90, %v73, 0
    %v116 = vsel %vm90, %v74, 0
    %v119 = vsel %vm90, %v75, 0
    %v122 = vsel %vm90, %v76, 0
    %v125 = vsel %vm90, %v77, 0
    %v128 = vsel %vm90, %v78, 0
    %v131 = vsel %vm90, %v79, 0
    %v134 = vsel %vm90, %v80, 0
    %v137 = vsel %vm90, %v81, 0
    %139 = vmatpush.msra.mxu0 0.0
    %140 = vmatpush.msra.mxu0 0.0
    %141 = vmatpush.msra.mxu0 0.0
    %142 = vmatpush.msra.mxu0 0.0
    %143 = vmatpush.msra.mxu0 0.0
    %144 = vmatpush.msra.mxu0 0.0
    %145 = vmatpush.msra.mxu0 0.0
    %146 = vmatpush.msra.mxu0 0.0
    %147 = vmatpush.msra.mxu0 0.0
    %148 = vmatpush.msra.mxu0 0.0
    %149 = vmatpush.msra.mxu0 0.0
    %150 = vmatpush.msra.mxu0 0.0
    %151 = vmatpush.msra.mxu0 %v85
    %152 = vmatpush.msra.mxu0 %v84
    %153 = vmatpush.msra.mxu0 %v83
    %154 = vmatpush.msra.mxu0 %v82
    %155 = vmatmul.f32.gmra.mxu0 %v92
    %v156 = vpop.f32.mrf.mxu0
    %v157 = vadd.f32 %v88, %v156
    %158 = vmatmul.f32.gmra.mxu0 %v95
    %v159 = vpop.f32.mrf.mxu0
    %v160 = vadd.f32 %v88, %v159
    %161 = vmatmul.f32.gmra.mxu0 %v98
    %v162 = vpop.f32.mrf.mxu0
    %v163 = vadd.f32 %v88, %v162
    %164 = vmatmul.f32.gmra.mxu0 %v101
    %v165 = vpop.f32.mrf.mxu0
    %v166 = vadd.f32 %v88, %v165
    %167 = vmatmul.f32.gmra.mxu0 %v104
    %v168 = vpop.f32.mrf.mxu0
    %v169 = vadd.f32 %v88, %v168
    %170 = vmatmul.f32.gmra.mxu0 %v107
    %v171 = vpop.f32.mrf.mxu0
    %v172 = vadd.f32 %v88, %v171
    %173 = vmatmul.f32.gmra.mxu0 %v110
    %v174 = vpop.f32.mrf.mxu0
    %v175 = vadd.f32 %v88, %v174
    %176 = vmatmul.f32.gmra.mxu0 %v113
    %v177 = vpop.f32.mrf.mxu0
    %v178 = vadd.f32 %v88, %v177
    %179 = vmatmul.f32.gmra.mxu0 %v116
    %v180 = vpop.f32.mrf.mxu0
    %v181 = vadd.f32 %v88, %v180
    %182 = vmatmul.f32.gmra.mxu0 %v119
    %v183 = vpop.f32.mrf.mxu0
    %v184 = vadd.f32 %v88, %v183
    %185 = vmatmul.f32.gmra.mxu0 %v122
    %v186 = vpop.f32.mrf.mxu0
    %v187 = vadd.f32 %v88, %v186
    %188 = vmatmul.f32.gmra.mxu0 %v125
    %v189 = vpop.f32.mrf.mxu0
    %v190 = vadd.f32 %v88, %v189
    %191 = vmatmul.f32.gmra.mxu0 %v128
    %v192 = vpop.f32.mrf.mxu0
    %v193 = vadd.f32 %v88, %v192
    %194 = vmatmul.f32.gmra.mxu0 %v131
    %v195 = vpop.f32.mrf.mxu0
    %v196 = vadd.f32 %v88, %v195
    %197 = vmatmul.f32.gmra.mxu0 %v134
    %v198 = vpop.f32.mrf.mxu0
    %v199 = vadd.f32 %v88, %v198
    %200 = vmatmul.f32.gmra.mxu0 %v137
    %v201 = vpop.f32.mrf.mxu0
    %v202 = vadd.f32 %v88, %v201
    %203 = vdwg.mxu0
    %v204 = vmul.f32 %v157, 0.2
    %v205 = vmul.f32 %v160, 0.2
    %v206 = vmul.f32 %v163, 0.2
    %v207 = vmul.f32 %v166, 0.2
    %v208 = vmul.f32 %v169, 0.2
    %v209 = vmul.f32 %v172, 0.2
    %v210 = vmul.f32 %v175, 0.2
    %v211 = vmul.f32 %v178, 0.2
    %v212 = vmul.f32 %v181, 0.2
    %v213 = vmul.f32 %v184, 0.2
    %v214 = vmul.f32 %v187, 0.2
    %v215 = vmul.f32 %v190, 0.2
    %v216 = vmul.f32 %v193, 0.2
    %v217 = vmul.f32 %v196, 0.2
    %v218 = vmul.f32 %v199, 0.2
    %v219 = vmul.f32 %v202, 0.2
    %v220 = vmax.f32 %v157, %v204
    %v221 = vmax.f32 %v160, %v205
    %v222 = vmax.f32 %v163, %v206
    %v223 = vmax.f32 %v166, %v207
    %v224 = vmax.f32 %v169, %v208
    %v225 = vmax.f32 %v172, %v209
    %v226 = vmax.f32 %v175, %v210
    %v227 = vmax.f32 %v178, %v211
    %v228 = vmax.f32 %v181, %v212
    %v229 = vmax.f32 %v184, %v213
    %v230 = vmax.f32 %v187, %v214
    %v231 = vmax.f32 %v190, %v215
    %v232 = vmax.f32 %v193, %v216
    %v233 = vmax.f32 %v196, %v217
    %v234 = vmax.f32 %v199, %v218
    %v235 = vmax.f32 %v202, %v219
    %v236 = vld [vmem:[#allocation3] sm:$0xff]
    %v237 = vld [vmem:[#allocation3 + $0x8] sm:$0xff]
    %v238 = vld [vmem:[#allocation3 + $0x10] sm:$0xff]
    %v239 = vld [vmem:[#allocation3 + $0x18] sm:$0xff]
    %v240 = vld [vmem:[#allocation3 + $0x20] sm:$0xff]
    %v241 = vld [vmem:[#allocation3 + $0x28] sm:$0xff]
    %v242 = vld [vmem:[#allocation3 + $0x30] sm:$0xff]
    %v243 = vld [vmem:[#allocation3 + $0x38] sm:$0xff]
    %v244 = vld [vmem:[#allocation3 + $0x40] sm:$0xff]
    %v245 = vld [vmem:[#allocation3 + $0x48] sm:$0xff]
    %v246 = vld [vmem:[#allocation3 + $0x50] sm:$0xff]
    %v247 = vld [vmem:[#allocation3 + $0x58] sm:$0xff]
    %v248 = vld [vmem:[#allocation3 + $0x60] sm:$0xff]
    %v249 = vld [vmem:[#allocation3 + $0x68] sm:$0xff]
    %v250 = vld [vmem:[#allocation3 + $0x70] sm:$0xff]
    %v251 = vld [vmem:[#allocation3 + $0x78] sm:$0xff]
    %v252 = vld [vmem:[#allocation3 + $0x80] sm:$0xff]
    %v253 = vld [vmem:[#allocation3 + $0x88] sm:$0xff]
    %v254 = vld [vmem:[#allocation3 + $0x90] sm:$0xff]
    %v255 = vld [vmem:[#allocation3 + $0x98] sm:$0xff]
    %v256 = vld [vmem:[#allocation3 + $0xa0] sm:$0xff]
    %v257 = vld [vmem:[#allocation3 + $0xa8] sm:$0xff]
    %v258 = vld [vmem:[#allocation3 + $0xb0] sm:$0xff]
    %v259 = vld [vmem:[#allocation3 + $0xb8] sm:$0xff]
    %v260 = vld [vmem:[#allocation3 + $0xc0] sm:$0xff]
    %v261 = vld [vmem:[#allocation3 + $0xc8] sm:$0xff]
    %v262 = vld [vmem:[#allocation3 + $0xd0] sm:$0xff]
    %v263 = vld [vmem:[#allocation3 + $0xd8] sm:$0xff]
    %v264 = vld [vmem:[#allocation3 + $0xe0] sm:$0xff]
    %v265 = vld [vmem:[#allocation3 + $0xe8] sm:$0xff]
    %v266 = vld [vmem:[#allocation3 + $0xf0] sm:$0xff]
    %v267 = vld [vmem:[#allocation3 + $0xf8] sm:$0xff]
    %v268 = vld [vmem:[%s4] sm:$0x3]
    %v270 = vperm.slane %v268, 0
    %v271 = vperm.slane %v268, 1
    %274 = vmatpush.msra.mxu0 %v266
    %275 = vmatpush.msra.mxu0 %v264
    %276 = vmatpush.msra.mxu0 %v262
    %277 = vmatpush.msra.mxu0 %v260
    %278 = vmatpush.msra.mxu0 %v258
    %279 = vmatpush.msra.mxu0 %v256
    %280 = vmatpush.msra.mxu0 %v254
    %281 = vmatpush.msra.mxu0 %v252
    %282 = vmatpush.msra.mxu0 %v250
    %283 = vmatpush.msra.mxu0 %v248
    %284 = vmatpush.msra.mxu0 %v246
    %285 = vmatpush.msra.mxu0 %v244
    %286 = vmatpush.msra.mxu0 %v242
    %287 = vmatpush.msra.mxu0 %v240
    %288 = vmatpush.msra.mxu0 %v238
    %289 = vmatpush.msra.mxu0 %v236
    %290 = vmatmul.f32.gmra.mxu0 %v220
    %v291 = vpop.f32.mrf.mxu0
    %v292 = vadd.f32 %v270, %v291
    %293 = vmatmul.f32.gmra.mxu0 %v221
    %v294 = vpop.f32.mrf.mxu0
    %v295 = vadd.f32 %v270, %v294
    %296 = vmatmul.f32.gmra.mxu0 %v222
    %v297 = vpop.f32.mrf.mxu0
    %v298 = vadd.f32 %v270, %v297
    %299 = vmatmul.f32.gmra.mxu0 %v223
    %v300 = vpop.f32.mrf.mxu0
    %v301 = vadd.f32 %v270, %v300
    %302 = vmatmul.f32.gmra.mxu0 %v224
    %v303 = vpop.f32.mrf.mxu0
    %v304 = vadd.f32 %v270, %v303
    %305 = vmatmul.f32.gmra.mxu0 %v225
    %v306 = vpop.f32.mrf.mxu0
    %v307 = vadd.f32 %v270, %v306
    %308 = vmatmul.f32.gmra.mxu0 %v226
    %v309 = vpop.f32.mrf.mxu0
    %v310 = vadd.f32 %v270, %v309
    %311 = vmatmul.f32.gmra.mxu0 %v227
    %v312 = vpop.f32.mrf.mxu0
    %v313 = vadd.f32 %v270, %v312
    %314 = vmatmul.f32.gmra.mxu0 %v228
    %v315 = vpop.f32.mrf.mxu0
    %v316 = vadd.f32 %v270, %v315
    %317 = vmatmul.f32.gmra.mxu0 %v229
    %v318 = vpop.f32.mrf.mxu0
    %v319 = vadd.f32 %v270, %v318
    %320 = vmatmul.f32.gmra.mxu0 %v230
    %v321 = vpop.f32.mrf.mxu0
    %v322 = vadd.f32 %v270, %v321
    %323 = vmatmul.f32.gmra.mxu0 %v231
    %v324 = vpop.f32.mrf.mxu0
    %v325 = vadd.f32 %v270, %v324
    %326 = vmatmul.f32.gmra.mxu0 %v232
    %v327 = vpop.f32.mrf.mxu0
    %v328 = vadd.f32 %v270, %v327
    %329 = vmatmul.f32.gmra.mxu0 %v233
    %v330 = vpop.f32.mrf.mxu0
    %v331 = vadd.f32 %v270, %v330
    %332 = vmatmul.f32.gmra.mxu0 %v234
    %v333 = vpop.f32.mrf.mxu0
    %v334 = vadd.f32 %v270, %v333
    %335 = vmatmul.f32.gmra.mxu0 %v235
    %v336 = vpop.f32.mrf.mxu0
    %v337 = vadd.f32 %v270, %v336
    %338 = vdwg.mxu0
    %339 = vmatpush.msra.mxu0 %v267
    %340 = vmatpush.msra.mxu0 %v265
    %341 = vmatpush.msra.mxu0 %v263
    %342 = vmatpush.msra.mxu0 %v261
    %343 = vmatpush.msra.mxu0 %v259
    %344 = vmatpush.msra.mxu0 %v257
    %345 = vmatpush.msra.mxu0 %v255
    %346 = vmatpush.msra.mxu0 %v253
    %347 = vmatpush.msra.mxu0 %v251
    %348 = vmatpush.msra.mxu0 %v249
    %349 = vmatpush.msra.mxu0 %v247
    %350 = vmatpush.msra.mxu0 %v245
    %351 = vmatpush.msra.mxu0 %v243
    %352 = vmatpush.msra.mxu0 %v241
    %353 = vmatpush.msra.mxu0 %v239
    %354 = vmatpush.msra.mxu0 %v237
    %355 = vmatmul.f32.gmra.mxu0 %v220
    %v356 = vpop.f32.mrf.mxu0
    %v357 = vadd.f32 %v271, %v356
    %358 = vmatmul.f32.gmra.mxu0 %v221
    %v359 = vpop.f32.mrf.mxu0
    %v360 = vadd.f32 %v271, %v359
    %361 = vmatmul.f32.gmra.mxu0 %v222
    %v362 = vpop.f32.mrf.mxu0
    %v363 = vadd.f32 %v271, %v362
    %364 = vmatmul.f32.gmra.mxu0 %v223
    %v365 = vpop.f32.mrf.mxu0
    %v366 = vadd.f32 %v271, %v365
    %367 = vmatmul.f32.gmra.mxu0 %v224
    %v368 = vpop.f32.mrf.mxu0
    %v369 = vadd.f32 %v271, %v368
    %370 = vmatmul.f32.gmra.mxu0 %v225
    %v371 = vpop.f32.mrf.mxu0
    %v372 = vadd.f32 %v271, %v371
    %373 = vmatmul.f32.gmra.mxu0 %v226
    %v374 = vpop.f32.mrf.mxu0
    %v375 = vadd.f32 %v271, %v374
    %376 = vmatmul.f32.gmra.mxu0 %v227
    %v377 = vpop.f32.mrf.mxu0
    %v378 = vadd.f32 %v271, %v377
    %379 = vmatmul.f32.gmra.mxu0 %v228
    %v380 = vpop.f32.mrf.mxu0
    %v381 = vadd.f32 %v271, %v380
    %382 = vmatmul.f32.gmra.mxu0 %v229
    %v383 = vpop.f32.mrf.mxu0
    %v384 = vadd.f32 %v271, %v383
    %385 = vmatmul.f32.gmra.mxu0 %v230
    %v386 = vpop.f32.mrf.mxu0
    %v387 = vadd.f32 %v271, %v386
    %388 = vmatmul.f32.gmra.mxu0 %v231
    %v389 = vpop.f32.mrf.mxu0
    %v390 = vadd.f32 %v271, %v389
    %391 = vmatmul.f32.gmra.mxu0 %v232
    %v392 = vpop.f32.mrf.mxu0
    %v393 = vadd.f32 %v271, %v392
    %394 = vmatmul.f32.gmra.mxu0 %v233
    %v395 = vpop.f32.mrf.mxu0
    %v396 = vadd.f32 %v271, %v395
    %397 = vmatmul.f32.gmra.mxu0 %v234
    %v398 = vpop.f32.mrf.mxu0
    %v399 = vadd.f32 %v271, %v398
    %400 = vmatmul.f32.gmra.mxu0 %v235
    %v401 = vpop.f32.mrf.mxu0
    %v402 = vadd.f32 %v271, %v401
    %403 = vdwg.mxu0
    %v404 = vmul.f32 %v292, 0.2
    %v405 = vmul.f32 %v357, 0.2
    %v406 = vmul.f32 %v295, 0.2
    %v407 = vmul.f32 %v360, 0.2
    %v408 = vmul.f32 %v298, 0.2
    %v409 = vmul.f32 %v363, 0.2
    %v410 = vmul.f32 %v301, 0.2
    %v411 = vmul.f32 %v366, 0.2
    %v412 = vmul.f32 %v304, 0.2
    %v413 = vmul.f32 %v369, 0.2
    %v414 = vmul.f32 %v307, 0.2
    %v415 = vmul.f32 %v372, 0.2
    %v416 = vmul.f32 %v310, 0.2
    %v417 = vmul.f32 %v375, 0.2
    %v418 = vmul.f32 %v313, 0.2
    %v419 = vmul.f32 %v378, 0.2
    %v420 = vmul.f32 %v316, 0.2
    %v421 = vmul.f32 %v381, 0.2
    %v422 = vmul.f32 %v319, 0.2
    %v423 = vmul.f32 %v384, 0.2
    %v424 = vmul.f32 %v322, 0.2
    %v425 = vmul.f32 %v387, 0.2
    %v426 = vmul.f32 %v325, 0.2
    %v427 = vmul.f32 %v390, 0.2
    %v428 = vmul.f32 %v328, 0.2
    %v429 = vmul.f32 %v393, 0.2
    %v430 = vmul.f32 %v331, 0.2
    %v431 = vmul.f32 %v396, 0.2
    %v432 = vmul.f32 %v334, 0.2
    %v433 = vmul.f32 %v399, 0.2
    %v434 = vmul.f32 %v337, 0.2
    %v435 = vmul.f32 %v402, 0.2
    %v436 = vmax.f32 %v292, %v404
    %v437 = vmax.f32 %v357, %v405
    %v438 = vmax.f32 %v295, %v406
    %v439 = vmax.f32 %v360, %v407
    %v440 = vmax.f32 %v298, %v408
    %v441 = vmax.f32 %v363, %v409
    %v442 = vmax.f32 %v301, %v410
    %v443 = vmax.f32 %v366, %v411
    %v444 = vmax.f32 %v304, %v412
    %v445 = vmax.f32 %v369, %v413
    %v446 = vmax.f32 %v307, %v414
    %v447 = vmax.f32 %v372, %v415
    %v448 = vmax.f32 %v310, %v416
    %v449 = vmax.f32 %v375, %v417
    %v450 = vmax.f32 %v313, %v418
    %v451 = vmax.f32 %v378, %v419
    %v452 = vmax.f32 %v316, %v420
    %v453 = vmax.f32 %v381, %v421
    %v454 = vmax.f32 %v319, %v422
    %v455 = vmax.f32 %v384, %v423
    %v456 = vmax.f32 %v322, %v424
    %v457 = vmax.f32 %v387, %v425
    %v458 = vmax.f32 %v325, %v426
    %v459 = vmax.f32 %v390, %v427
    %v460 = vmax.f32 %v328, %v428
    %v461 = vmax.f32 %v393, %v429
    %v462 = vmax.f32 %v331, %v430
    %v463 = vmax.f32 %v396, %v431
    %v464 = vmax.f32 %v334, %v432
    %v465 = vmax.f32 %v399, %v433
    %v466 = vmax.f32 %v337, %v434
    %v467 = vmax.f32 %v402, %v435
    %v468 = vld [vmem:[#allocation6] sm:$0xff]
    %v469 = vld [vmem:[#allocation6 + $0x8] sm:$0xff]
    %v470 = vld [vmem:[#allocation6 + $0x10] sm:$0xff]
    %v471 = vld [vmem:[#allocation6 + $0x18] sm:$0xff]
    %v472 = vld [vmem:[#allocation6 + $0x20] sm:$0xff]
    %v473 = vld [vmem:[#allocation6 + $0x28] sm:$0xff]
    %v474 = vld [vmem:[#allocation6 + $0x30] sm:$0xff]
    %v475 = vld [vmem:[#allocation6 + $0x38] sm:$0xff]
    %v476 = vld [vmem:[#allocation6 + $0x40] sm:$0xff]
    %v477 = vld [vmem:[#allocation6 + $0x48] sm:$0xff]
    %v478 = vld [vmem:[#allocation6 + $0x50] sm:$0xff]
    %v479 = vld [vmem:[#allocation6 + $0x58] sm:$0xff]
    %v480 = vld [vmem:[#allocation6 + $0x60] sm:$0xff]
    %v481 = vld [vmem:[#allocation6 + $0x68] sm:$0xff]
    %v482 = vld [vmem:[#allocation6 + $0x70] sm:$0xff]
    %v483 = vld [vmem:[#allocation6 + $0x78] sm:$0xff]
    %v484 = vld [vmem:[#allocation6 + $0x80] sm:$0xff]
    %v485 = vld [vmem:[#allocation6 + $0x88] sm:$0xff]
    %v486 = vld [vmem:[#allocation6 + $0x90] sm:$0xff]
    %v487 = vld [vmem:[#allocation6 + $0x98] sm:$0xff]
    %v488 = vld [vmem:[#allocation6 + $0xa0] sm:$0xff]
    %v489 = vld [vmem:[#allocation6 + $0xa8] sm:$0xff]
    %v490 = vld [vmem:[#allocation6 + $0xb0] sm:$0xff]
    %v491 = vld [vmem:[#allocation6 + $0xb8] sm:$0xff]
    %v492 = vld [vmem:[#allocation6 + $0xc0] sm:$0xff]
    %v493 = vld [vmem:[#allocation6 + $0xc8] sm:$0xff]
    %v494 = vld [vmem:[#allocation6 + $0xd0] sm:$0xff]
    %v495 = vld [vmem:[#allocation6 + $0xd8] sm:$0xff]
    %v496 = vld [vmem:[#allocation6 + $0xe0] sm:$0xff]
    %v497 = vld [vmem:[#allocation6 + $0xe8] sm:$0xff]
    %v498 = vld [vmem:[#allocation6 + $0xf0] sm:$0xff]
    %v499 = vld [vmem:[#allocation6 + $0xf8] sm:$0xff]
    %v500 = vld [vmem:[%s6] sm:$0x1]
    %v502 = vperm.slane %v500, 0
    %504 = vmatpush.msra.mxu0 %v483
    %505 = vmatpush.msra.mxu0 %v482
    %506 = vmatpush.msra.mxu0 %v481
    %507 = vmatpush.msra.mxu0 %v480
    %508 = vmatpush.msra.mxu0 %v479
    %509 = vmatpush.msra.mxu0 %v478
    %510 = vmatpush.msra.mxu0 %v477
    %511 = vmatpush.msra.mxu0 %v476
    %512 = vmatpush.msra.mxu0 %v475
    %513 = vmatpush.msra.mxu0 %v474
    %514 = vmatpush.msra.mxu0 %v473
    %515 = vmatpush.msra.mxu0 %v472
    %516 = vmatpush.msra.mxu0 %v471
    %517 = vmatpush.msra.mxu0 %v470
    %518 = vmatpush.msra.mxu0 %v469
    %519 = vmatpush.msra.mxu0 %v468
    %520 = vmatmul.f32.gmra.mxu0 %v436
    %v521 = vpop.f32.mrf.mxu0
    %v522 = vadd.f32 %v502, %v521
    %523 = vmatmul.f32.gmra.mxu0 %v438
    %v524 = vpop.f32.mrf.mxu0
    %v525 = vadd.f32 %v502, %v524
    %526 = vmatmul.f32.gmra.mxu0 %v440
    %v527 = vpop.f32.mrf.mxu0
    %v528 = vadd.f32 %v502, %v527
    %529 = vmatmul.f32.gmra.mxu0 %v442
    %v530 = vpop.f32.mrf.mxu0
    %v531 = vadd.f32 %v502, %v530
    %532 = vmatmul.f32.gmra.mxu0 %v444
    %v533 = vpop.f32.mrf.mxu0
    %v534 = vadd.f32 %v502, %v533
    %535 = vmatmul.f32.gmra.mxu0 %v446
    %v536 = vpop.f32.mrf.mxu0
    %v537 = vadd.f32 %v502, %v536
    %538 = vmatmul.f32.gmra.mxu0 %v448
    %v539 = vpop.f32.mrf.mxu0
    %v540 = vadd.f32 %v502, %v539
    %541 = vmatmul.f32.gmra.mxu0 %v450
    %v542 = vpop.f32.mrf.mxu0
    %v543 = vadd.f32 %v502, %v542
    %544 = vmatmul.f32.gmra.mxu0 %v452
    %v545 = vpop.f32.mrf.mxu0
    %v546 = vadd.f32 %v502, %v545
    %547 = vmatmul.f32.gmra.mxu0 %v454
    %v548 = vpop.f32.mrf.mxu0
    %v549 = vadd.f32 %v502, %v548
    %550 = vmatmul.f32.gmra.mxu0 %v456
    %v551 = vpop.f32.mrf.mxu0
    %v552 = vadd.f32 %v502, %v551
    %553 = vmatmul.f32.gmra.mxu0 %v458
    %v554 = vpop.f32.mrf.mxu0
    %v555 = vadd.f32 %v502, %v554
    %556 = vmatmul.f32.gmra.mxu0 %v460
    %v557 = vpop.f32.mrf.mxu0
    %v558 = vadd.f32 %v502, %v557
    %559 = vmatmul.f32.gmra.mxu0 %v462
    %v560 = vpop.f32.mrf.mxu0
    %v561 = vadd.f32 %v502, %v560
    %562 = vmatmul.f32.gmra.mxu0 %v464
    %v563 = vpop.f32.mrf.mxu0
    %v564 = vadd.f32 %v502, %v563
    %565 = vmatmul.f32.gmra.mxu0 %v466
    %v566 = vpop.f32.mrf.mxu0
    %v567 = vadd.f32 %v502, %v566
    %568 = vdwg.mxu0
    %569 = vmatpush.msra.mxu0 %v499
    %570 = vmatpush.msra.mxu0 %v498
    %571 = vmatpush.msra.mxu0 %v497
    %572 = vmatpush.msra.mxu0 %v496
    %573 = vmatpush.msra.mxu0 %v495
    %574 = vmatpush.msra.mxu0 %v494
    %575 = vmatpush.msra.mxu0 %v493
    %576 = vmatpush.msra.mxu0 %v492
    %577 = vmatpush.msra.mxu0 %v491
    %578 = vmatpush.msra.mxu0 %v490
    %579 = vmatpush.msra.mxu0 %v489
    %580 = vmatpush.msra.mxu0 %v488
    %581 = vmatpush.msra.mxu0 %v487
    %582 = vmatpush.msra.mxu0 %v486
    %583 = vmatpush.msra.mxu0 %v485
    %584 = vmatpush.msra.mxu0 %v484
    %585 = vmatmul.f32.gmra.mxu0 %v437
    %v586 = vpop.f32.mrf.mxu0
    %v587 = vadd.f32 %v522, %v586
    %588 = vmatmul.f32.gmra.mxu0 %v439
    %v589 = vpop.f32.mrf.mxu0
    %v590 = vadd.f32 %v525, %v589
    %591 = vmatmul.f32.gmra.mxu0 %v441
    %v592 = vpop.f32.mrf.mxu0
    %v593 = vadd.f32 %v528, %v592
    %594 = vmatmul.f32.gmra.mxu0 %v443
    %v595 = vpop.f32.mrf.mxu0
    %v596 = vadd.f32 %v531, %v595
    %597 = vmatmul.f32.gmra.mxu0 %v445
    %v598 = vpop.f32.mrf.mxu0
    %v599 = vadd.f32 %v534, %v598
    %600 = vmatmul.f32.gmra.mxu0 %v447
    %v601 = vpop.f32.mrf.mxu0
    %v602 = vadd.f32 %v537, %v601
    %603 = vmatmul.f32.gmra.mxu0 %v449
    %v604 = vpop.f32.mrf.mxu0
    %v605 = vadd.f32 %v540, %v604
    %606 = vmatmul.f32.gmra.mxu0 %v451
    %v607 = vpop.f32.mrf.mxu0
    %v608 = vadd.f32 %v543, %v607
    %609 = vmatmul.f32.gmra.mxu0 %v453
    %v610 = vpop.f32.mrf.mxu0
    %v611 = vadd.f32 %v546, %v610
    %612 = vmatmul.f32.gmra.mxu0 %v455
    %v613 = vpop.f32.mrf.mxu0
    %v614 = vadd.f32 %v549, %v613
    %615 = vmatmul.f32.gmra.mxu0 %v457
    %v616 = vpop.f32.mrf.mxu0
    %v617 = vadd.f32 %v552, %v616
    %618 = vmatmul.f32.gmra.mxu0 %v459
    %v619 = vpop.f32.mrf.mxu0
    %v620 = vadd.f32 %v555, %v619
    %621 = vmatmul.f32.gmra.mxu0 %v461
    %v622 = vpop.f32.mrf.mxu0
    %v623 = vadd.f32 %v558, %v622
    %624 = vmatmul.f32.gmra.mxu0 %v463
    %v625 = vpop.f32.mrf.mxu0
    %v626 = vadd.f32 %v561, %v625
    %627 = vmatmul.f32.gmra.mxu0 %v465
    %v628 = vpop.f32.mrf.mxu0
    %v629 = vadd.f32 %v564, %v628
    %630 = vmatmul.f32.gmra.mxu0 %v467
    %v631 = vpop.f32.mrf.mxu0
    %v632 = vadd.f32 %v567, %v631
    %633 = vdwg.mxu0
    %v634 = vmul.f32 %v587, 0.2
    %v635 = vmul.f32 %v590, 0.2
    %v636 = vmul.f32 %v593, 0.2
    %v637 = vmul.f32 %v596, 0.2
    %v638 = vmul.f32 %v599, 0.2
    %v639 = vmul.f32 %v602, 0.2
    %v640 = vmul.f32 %v605, 0.2
    %v641 = vmul.f32 %v608, 0.2
    %v642 = vmul.f32 %v611, 0.2
    %v643 = vmul.f32 %v614, 0.2
    %v644 = vmul.f32 %v617, 0.2
    %v645 = vmul.f32 %v620, 0.2
    %v646 = vmul.f32 %v623, 0.2
    %v647 = vmul.f32 %v626, 0.2
    %v648 = vmul.f32 %v629, 0.2
    %v649 = vmul.f32 %v632, 0.2
    %v650 = vmax.f32 %v587, %v634
    %v651 = vmax.f32 %v590, %v635
    %v652 = vmax.f32 %v593, %v636
    %v653 = vmax.f32 %v596, %v637
    %v654 = vmax.f32 %v599, %v638
    %v655 = vmax.f32 %v602, %v639
    %v656 = vmax.f32 %v605, %v640
    %v657 = vmax.f32 %v608, %v641
    %v658 = vmax.f32 %v611, %v642
    %v659 = vmax.f32 %v614, %v643
    %v660 = vmax.f32 %v617, %v644
    %v661 = vmax.f32 %v620, %v645
    %v662 = vmax.f32 %v623, %v646
    %v663 = vmax.f32 %v626, %v647
    %v664 = vmax.f32 %v629, %v648
    %v665 = vmax.f32 %v632, %v649
    %v666 = vld [vmem:[%s7] sm:$0x1]
    %s667 = sld [smem:[#allocation2]]
    %v668 = vstv %s667
    %669 = vmatpush.xpose.msra.mxu0 %v665
    %670 = vmatpush.xpose.msra.mxu0 %v664
    %671 = vmatpush.xpose.msra.mxu0 %v663
    %672 = vmatpush.xpose.msra.mxu0 %v662
    %673 = vmatpush.xpose.msra.mxu0 %v661
    %674 = vmatpush.xpose.msra.mxu0 %v660
    %675 = vmatpush.xpose.msra.mxu0 %v659
    %676 = vmatpush.xpose.msra.mxu0 %v658
    %677 = vmatpush.xpose.msra.mxu0 %v657
    %678 = vmatpush.xpose.msra.mxu0 %v656
    %679 = vmatpush.xpose.msra.mxu0 %v655
    %680 = vmatpush.xpose.msra.mxu0 %v654
    %681 = vmatpush.xpose.msra.mxu0 %v653
    %682 = vmatpush.xpose.msra.mxu0 %v652
    %683 = vmatpush.xpose.msra.mxu0 %v651
    %684 = vmatpush.xpose.msra.mxu0 %v650
    %685 = vmatmul.f32.gmra.mxu0 %v666
    %v686 = vpop.f32.mrf.mxu0
    %v687 = vadd.f32 %v668, %v686
    %688 = vdwg.mxu0
    %v689 = vsub.f32 0.0, %v687
    %v690 = vmul.f32 %v689, 1.442695
    %v691 = vpow.pop %v690
    %v692 = vadd.f32 %v691, 1.0
    %v693 = vrcp.pop %v692
    %v694 = vmul.f32 %v692, %v693
    %v695 = vsub.f32 1.0, %v694
    %v696 = vmul.f32 %v693, %v695
    %v697 = vadd.f32 %v693, %v696
    %vm698 = vweird.f32 %v692
    %vm699 = vweird.f32 %v693
    %vm700 = vmor %vm698, %vm699
    %v701 = vsel %vm700, %v693, %v697
    %v702 = vand.u32 2147483647, %v692
    %vm703 = vcmp.eq.f32.partialorder %v702, 8.507059e+37
    %v704 = vand.u32 %v692, 2147483648
    %v705 = vor.u32 1.1754944e-38, %v704
    %v706 = vsel %vm703, %v705, %v701
    %v707 = vmul.f32 1.0, %v706
    %708 = vst [vmem:[#allocation8] sm:$0x1] %v707
    // Predicated region
    $region46: #{tpu_custom_call.1} parent=1 // pred_check
      _
    $region47: #{tpu_custom_call.1} parent=1 // pred_check_branch
      %710 = sbr.rel (0) target = $region49
    $region48: #{tpu_custom_call.1} parent=1 // pred_region
      %712 = vsyncadd [#allocation5], 0
      %s714 = sshll.u32 [#allocation8], 4
      %s715 = int_to_ptr.vmem [resolvable:$true] %s714
      %s716 = sshll.u32 %s9, 4
      %s717 = int_to_ptr.hbm [resolvable:$true] %s716
      %719 = dma.vmem_to_hbm [thread:$0]  %s715, 16, %s717, [#allocation5]
    $region49: #{tpu_custom_call.1} parent=1 // pred_fallthru
      _
    // Predicated region
    $region50: #{tpu_custom_call.1} parent=1 // pred_check
      _
    $region51: #{tpu_custom_call.1} parent=1 // pred_check_branch
      %721 = sbr.rel (0) target = $region53
    $region52: #{tpu_custom_call.1} parent=1 // pred_region
      %723 = dma.done [#allocation5], 16
    $region53: #{tpu_custom_call.1} parent=1 // pred_fallthru
      _
    %724 = vsyncpa [#allocation4], 1
    %725 = vsyncpa [#allocation7], 1
    %726 = vsyncpa [#allocation5], 1

</llo_original>
